<compile_context>
chip_gen: v7x
topology: tpu7x:2x2x1
jax: 0.10.0
libtpu: 0.0.40
codegen_flags: <defaults>
</compile_context>

<pallas_src>
import functools

import jax
import jax.numpy as jnp
from jax.experimental import pallas as pl
from jax.experimental.pallas import tpu as pltpu


def _attention_kernel(out_ref, ctx_ref, wm_ref, wo_ref, b_ref, y_ref, attn_ref,
                      *, approx_recip):
    # out_ref : (BB, Tq, H)   decoder states ("output"), matmul dtype (pre-cast)
    # ctx_ref : (BB, Tk, H)   encoder states ("context"), matmul dtype
    # wm_ref  : (H, H)        W_mix  = linear_out.weight[:, :H].T
    # wo_ref  : (H, H)        W_out  = linear_out.weight[:, H:].T
    # b_ref   : (1, H)        linear_out.bias (f32)
    # y_ref   : (BB, Tq, H)   tanh(linear_out(cat(mix, output)))
    # attn_ref: (BB, Tq, Tk)  softmax attention weights
    BB, Tq, H = out_ref.shape
    Tk = ctx_ref.shape[1]

    o = out_ref[...]                                    # matmul-dtype operands
    c = ctx_ref[...]

    # scores = output @ context^T : batched dot contracting the last dims of
    # both operands -> no explicit transpose / relayout of `context`.
    scores = jnp.einsum("bqh,bkh->bqk", o, c,
                        preferred_element_type=jnp.float32)        # (BB,Tq,Tk)

    # TODO(synk): optional `self.mask` masked_fill_(-inf) not applied (mask is
    # None by default in the PyTorch module).

    # Numerically stable softmax along Tk (f32; v5e has no bf16 VPU/EUP).
    m = jnp.max(scores, axis=-1, keepdims=True)
    e = jnp.exp(scores - m)
    s = jnp.sum(e, axis=-1, keepdims=True)
    attn = e * pl.reciprocal(s, approx=approx_recip)               # (BB,Tq,Tk)

    # mix = attn @ context (batched).
    mix = jnp.einsum("bqk,bkh->bqh", attn.astype(c.dtype), c,
                     preferred_element_type=jnp.float32)           # (BB,Tq,H)

    # Fused projection, no concat / no weight broadcast:
    #   tanh(cat(mix, output) @ W.T + b)
    #     == tanh(mix @ W_mix + output @ W_out + b)
    # Leading (batch, Tq) dims are merged into one M dimension so the MXU sees
    # two (BB*Tq, H) x (H, H) matmuls accumulated in f32.
    mix2d = mix.astype(o.dtype).reshape(BB * Tq, H)
    out2d = o.reshape(BB * Tq, H)
    y2d = (jnp.dot(mix2d, wm_ref[...], preferred_element_type=jnp.float32)
           + jnp.dot(out2d, wo_ref[...], preferred_element_type=jnp.float32)
           + b_ref[...])
    y = jnp.tanh(y2d)                                              # (BB*Tq, H)

    y_ref[...] = y.reshape(BB, Tq, H).astype(y_ref.dtype)
    attn_ref[...] = attn.astype(attn_ref.dtype)


def _choose_batch_block(B, Tq, Tk, H, act_bytes, y_bytes, attn_bytes,
                        vmem_budget_bytes):
    """Largest divisor of B that (a) keeps the double-buffered per-step
    footprint under the VMEM budget and (b) leaves >= ~4 grid steps when B
    allows, so the BlockSpec pipeline can overlap DMA with compute and the
    'parallel' batch axis can feed both TensorCores (v7x)."""
    per_batch = 2 * ((Tq + Tk) * H * act_bytes        # double-buffered inputs
                     + Tq * H * y_bytes               # double-buffered y out
                     + Tq * Tk * attn_bytes)          # double-buffered attn out
    per_batch += 4 * (2 * Tq * Tk + 2 * Tq * H)       # f32 intermediates
    bb = max(1, min(B, vmem_budget_bytes // per_batch))
    bb = min(bb, max(1, B // 4))                      # aim for nb >= 4
    while B % bb:
        bb -= 1
    return bb


def attention_forward(output, context, W, b, *, batch_block=None,
                      matmul_dtype=jnp.bfloat16, approx_recip=False,
                      attn_dtype=jnp.float32,
                      vmem_budget_bytes=8 << 20):
    """output: (B, Tq, H), context: (B, Tk, H), W: (H, 2H), b: (H,).

    Returns (y, attn) with y: (B, Tq, H) in output.dtype and
    attn: (B, Tq, Tk) in attn_dtype, matching the PyTorch module's forward.
    """
    B, Tq, H = output.shape
    _, Tk, _ = context.shape
    out_dtype = output.dtype

    act_bytes = jnp.dtype(matmul_dtype).itemsize
    if batch_block is None:
        batch_block = _choose_batch_block(
            B, Tq, Tk, H, act_bytes,
            jnp.dtype(out_dtype).itemsize, jnp.dtype(attn_dtype).itemsize,
            vmem_budget_bytes)
    assert B % batch_block == 0, "batch_block must divide B"
    nb = B // batch_block

    # Wrapper-side casts: bf16 operands halve the HBM->VMEM bytes of the two
    # activation streams and the weight (an in-kernel astype would not).
    o_in = jnp.asarray(output).astype(matmul_dtype)
    c_in = jnp.asarray(context).astype(matmul_dtype)
    W = jnp.asarray(W)
    w_mix = W[:, :H].T.astype(matmul_dtype)        # (H, H)
    w_out = W[:, H:].T.astype(matmul_dtype)        # (H, H)
    b2 = jnp.asarray(b).reshape(1, H).astype(jnp.float32)

    kernel = functools.partial(_attention_kernel, approx_recip=approx_recip)

    return pl.pallas_call(
        kernel,
        out_shape=(
            jax.ShapeDtypeStruct((B, Tq, H), out_dtype),     # tanh(linear(...))
            jax.ShapeDtypeStruct((B, Tq, Tk), attn_dtype),   # attention weights
        ),
        grid_spec=pltpu.PrefetchScalarGridSpec(
            num_scalar_prefetch=0,
            grid=(nb,),
            in_specs=[
                pl.BlockSpec((batch_block, Tq, H), lambda i: (i, 0, 0)),
                pl.BlockSpec((batch_block, Tk, H), lambda i: (i, 0, 0)),
                pl.BlockSpec((H, H), lambda i: (0, 0)),      # weight resident
                pl.BlockSpec((H, H), lambda i: (0, 0)),
                pl.BlockSpec((1, H), lambda i: (0, 0)),
            ],
            out_specs=[
                pl.BlockSpec((batch_block, Tq, H), lambda i: (i, 0, 0)),
                pl.BlockSpec((batch_block, Tq, Tk), lambda i: (i, 0, 0)),
            ],
        ),
        compiler_params=pltpu.CompilerParams(
            # Batch-block axis is independent -> shards across TensorCores
            # (megacore on v7x) when nb > 1.
            dimension_semantics=("parallel",),
            # Explicit limit with headroom; safe on v5e/v6e/v7x given the
            # conservative batch_block budget above.
            vmem_limit_bytes=32 << 20,
        ),
    )(o_in, c_in, w_mix, w_out, b2)


def _reference(output, context, W, b, matmul_dtype=jnp.float32):
    """Pure-JAX reference mirroring the PyTorch forward (and the kernel's
    optional bf16 matmul-operand casting)."""
    o = output.astype(matmul_dtype)
    c = context.astype(matmul_dtype)
    scores = jnp.einsum("bqh,bkh->bqk", o, c,
                        preferred_element_type=jnp.float32)
    attn = jax.nn.softmax(scores, axis=-1)
    mix = jnp.einsum("bqk,bkh->bqh", attn.astype(matmul_dtype), c,
                     preferred_element_type=jnp.float32)
    combined = jnp.concatenate([mix, output], axis=-1).astype(matmul_dtype)
    y = jnp.tanh(
        jnp.einsum("bqd,dh->bqh", combined, W.T.astype(matmul_dtype),
                   preferred_element_type=jnp.float32) + b)
    return y, attn


if __name__ == "__main__":
    B, Tq, Tk, H = 2, 8, 8, 32

    key = jax.random.PRNGKey(0)
    k1, k2, k3, k4 = jax.random.split(key, 4)

    output = jax.random.normal(k1, (B, Tq, H), dtype=jnp.float32)
    context = jax.random.normal(k2, (B, Tk, H), dtype=jnp.float32)
    # nn.Linear(dim*2, dim): weight (H, 2H), bias (H,) — deterministic init.
    W = jax.random.normal(k3, (H, 2 * H), dtype=jnp.float32) * 0.05
    b = jax.random.normal(k4, (H,), dtype=jnp.float32) * 0.05

    # --- f32 path: exact PyTorch semantics, tight tolerance -----------------
    y, attn = attention_forward(output, context, W, b,
                                matmul_dtype=jnp.float32)
    jax.block_until_ready((y, attn))
    y_ref, attn_ref = _reference(output, context, W, b, jnp.float32)
    assert jnp.allclose(y, y_ref, atol=1e-5, rtol=1e-5)
    assert jnp.allclose(attn, attn_ref, atol=1e-5, rtol=1e-5)

    # --- default bf16 MXU path: bf16 operands, f32 accumulation -------------
    y16, attn16 = attention_forward(output, context, W, b)
    jax.block_until_ready((y16, attn16))
    y16_ref, attn16_ref = _reference(output, context, W, b, jnp.bfloat16)
    assert jnp.allclose(y16, y16_ref, atol=1e-3, rtol=1e-3)
    assert jnp.allclose(attn16, attn16_ref, atol=1e-3, rtol=1e-3)

    print("KERNEL_OK")
</pallas_src>

<mosaic_0001>
module attributes {stable_mosaic.version = 11 : i64} {
  func.func @_attention_kernel(%arg0: i32, %arg1: memref<1x8x32xf32, #tpu.memory_space<vmem>>, %arg2: memref<1x8x32xf32, #tpu.memory_space<vmem>>, %arg3: memref<32x32xf32, #tpu.memory_space<vmem>>, %arg4: memref<32x32xf32, #tpu.memory_space<vmem>>, %arg5: memref<1x32xf32, #tpu.memory_space<vmem>>, %arg6: memref<1x8x32xf32, #tpu.memory_space<vmem>>, %arg7: memref<1x8x8xf32, #tpu.memory_space<vmem>>) attributes {dimension_semantics = [#tpu.dimension_semantics<parallel>], iteration_bounds = array<i64: 2>, scalar_prefetch = 0 : i64, scratch_operands = 0 : i64, tpu.core_type = #tpu.core_type<tc>, window_params = [{transform_indices = @transform_0, window_bounds = array<i64: 1, 8, 32>}, {transform_indices = @transform_1, window_bounds = array<i64: 1, 8, 32>}, {pipeline_mode = #tpu.pipeline_mode<synchronous>, transform_indices = @transform_2, window_bounds = array<i64: 32, 32>}, {pipeline_mode = #tpu.pipeline_mode<synchronous>, transform_indices = @transform_3, window_bounds = array<i64: 32, 32>}, {pipeline_mode = #tpu.pipeline_mode<synchronous>, transform_indices = @transform_4, window_bounds = array<i64: 1, 32>}, {transform_indices = @transform_5, window_bounds = array<i64: 1, 8, 32>}, {transform_indices = @transform_6, window_bounds = array<i64: 1, 8, 8>}]} {
    %c0 = arith.constant 0 : index
    %c0_0 = arith.constant 0 : index
    %c0_1 = arith.constant 0 : index
    %0 = vector.load %arg1[%c0, %c0_0, %c0_1] : memref<1x8x32xf32, #tpu.memory_space<vmem>>, vector<1x8x32xf32>
    %c0_2 = arith.constant 0 : index
    %c0_3 = arith.constant 0 : index
    %c0_4 = arith.constant 0 : index
    %1 = vector.load %arg2[%c0_2, %c0_3, %c0_4] : memref<1x8x32xf32, #tpu.memory_space<vmem>>, vector<1x8x32xf32>
    "tpu.trace_start"() <{level = 10 : i32, message = "bqh,bkh->bqk"}> : () -> ()
    %cst = arith.constant dense<0.000000e+00> : vector<1x8x8xf32>
    %2 = tpu.matmul %0, %1, %cst {dimension_numbers = #tpu.dot_dimension_numbers<[2], [2], [1], [1], [0, 0, 0, 1, 1, 1], [0], [0]>} : vector<1x8x32xf32>, vector<1x8x32xf32>, vector<1x8x8xf32> -> vector<1x8x8xf32>
    "tpu.trace_stop"() : () -> ()
    %cst_5 = arith.constant dense<0xFF800000> : vector<1x8xf32>
    %3 = vector.multi_reduction <maximumf>, %2, %cst_5 [2] : vector<1x8x8xf32> to vector<1x8xf32>
    %4 = vector.shape_cast %3 : vector<1x8xf32> to vector<1x8x1xf32>
    %5 = vector.broadcast %4 : vector<1x8x1xf32> to vector<1x8x8xf32>
    %6 = arith.subf %2, %5 : vector<1x8x8xf32>
    %7 = math.exp %6 : vector<1x8x8xf32>
    %cst_6 = arith.constant dense<0.000000e+00> : vector<1x8xf32>
    %8 = vector.multi_reduction <add>, %7, %cst_6 [2] : vector<1x8x8xf32> to vector<1x8xf32>
    %9 = vector.shape_cast %8 : vector<1x8xf32> to vector<1x8x1xf32>
    %10 = tpu.reciprocal %9 : vector<1x8x1xf32> -> vector<1x8x1xf32>
    %11 = vector.broadcast %10 : vector<1x8x1xf32> to vector<1x8x8xf32>
    %12 = arith.mulf %7, %11 : vector<1x8x8xf32>
    "tpu.trace_start"() <{level = 10 : i32, message = "bqk,bkh->bqh"}> : () -> ()
    %cst_7 = arith.constant dense<0.000000e+00> : vector<1x8x32xf32>
    %13 = tpu.matmul %12, %1, %cst_7 {dimension_numbers = #tpu.dot_dimension_numbers<[2], [1], [1], [2], [0, 0, 0, 1, 1, 2], [0], [0]>} : vector<1x8x8xf32>, vector<1x8x32xf32>, vector<1x8x32xf32> -> vector<1x8x32xf32>
    "tpu.trace_stop"() : () -> ()
    %14 = vector.shape_cast %13 : vector<1x8x32xf32> to vector<8x32xf32>
    %15 = vector.shape_cast %0 : vector<1x8x32xf32> to vector<8x32xf32>
    %c0_8 = arith.constant 0 : index
    %c0_9 = arith.constant 0 : index
    %16 = vector.load %arg3[%c0_8, %c0_9] : memref<32x32xf32, #tpu.memory_space<vmem>>, vector<32x32xf32>
    %cst_10 = arith.constant dense<0.000000e+00> : vector<8x32xf32>
    %17 = tpu.matmul %14, %16, %cst_10 {dimension_numbers = #tpu.dot_dimension_numbers<[1], [0], [0], [1], [0, 0, 1, 1], [], []>} : vector<8x32xf32>, vector<32x32xf32>, vector<8x32xf32> -> vector<8x32xf32>
    %c0_11 = arith.constant 0 : index
    %c0_12 = arith.constant 0 : index
    %18 = vector.load %arg4[%c0_11, %c0_12] : memref<32x32xf32, #tpu.memory_space<vmem>>, vector<32x32xf32>
    %cst_13 = arith.constant dense<0.000000e+00> : vector<8x32xf32>
    %19 = tpu.matmul %15, %18, %cst_13 {dimension_numbers = #tpu.dot_dimension_numbers<[1], [0], [0], [1], [0, 0, 1, 1], [], []>} : vector<8x32xf32>, vector<32x32xf32>, vector<8x32xf32> -> vector<8x32xf32>
    %20 = arith.addf %17, %19 : vector<8x32xf32>
    %c0_14 = arith.constant 0 : index
    %c0_15 = arith.constant 0 : index
    %21 = vector.load %arg5[%c0_14, %c0_15] : memref<1x32xf32, #tpu.memory_space<vmem>>, vector<1x32xf32>
    %22 = vector.broadcast %21 : vector<1x32xf32> to vector<8x32xf32>
    %23 = arith.addf %20, %22 : vector<8x32xf32>
    %24 = math.tanh %23 : vector<8x32xf32>
    %25 = vector.shape_cast %24 : vector<8x32xf32> to vector<1x8x32xf32>
    %c0_16 = arith.constant 0 : index
    %c0_17 = arith.constant 0 : index
    %c0_18 = arith.constant 0 : index
    %26 = vector.load %arg6[%c0_16, %c0_17, %c0_18] : memref<1x8x32xf32, #tpu.memory_space<vmem>>, vector<1x8x32xf32>
    tpu.vector_store %arg6[%c0_16, %c0_17, %c0_18], %25 {strides = array<i32>} : memref<1x8x32xf32, #tpu.memory_space<vmem>>, vector<1x8x32xf32>,
    %c0_19 = arith.constant 0 : index
    %c0_20 = arith.constant 0 : index
    %c0_21 = arith.constant 0 : index
    %27 = vector.load %arg7[%c0_19, %c0_20, %c0_21] : memref<1x8x8xf32, #tpu.memory_space<vmem>>, vector<1x8x8xf32>
    tpu.vector_store %arg7[%c0_19, %c0_20, %c0_21], %12 {strides = array<i32>} : memref<1x8x8xf32, #tpu.memory_space<vmem>>, vector<1x8x8xf32>,
    return
  }
  func.func @transform_0(%arg0: i32) -> (i32, i32, i32) {
    %c0_i32 = arith.constant 0 : i32
    %c0_i32_0 = arith.constant 0 : i32
    %c0_i32_1 = arith.constant 0 : i32
    return %arg0, %c0_i32, %c0_i32_0 : i32, i32, i32
  }
  func.func @transform_1(%arg0: i32) -> (i32, i32, i32) {
    %c0_i32 = arith.constant 0 : i32
    %c0_i32_0 = arith.constant 0 : i32
    %c0_i32_1 = arith.constant 0 : i32
    return %arg0, %c0_i32, %c0_i32_0 : i32, i32, i32
  }
  func.func @transform_2(%arg0: i32) -> (i32, i32) {
    %c0_i32 = arith.constant 0 : i32
    %c0_i32_0 = arith.constant 0 : i32
    %c0_i32_1 = arith.constant 0 : i32
    return %c0_i32, %c0_i32_0 : i32, i32
  }
  func.func @transform_3(%arg0: i32) -> (i32, i32) {
    %c0_i32 = arith.constant 0 : i32
    %c0_i32_0 = arith.constant 0 : i32
    %c0_i32_1 = arith.constant 0 : i32
    return %c0_i32, %c0_i32_0 : i32, i32
  }
  func.func @transform_4(%arg0: i32) -> (i32, i32) {
    %c0_i32 = arith.constant 0 : i32
    %c0_i32_0 = arith.constant 0 : i32
    %c0_i32_1 = arith.constant 0 : i32
    return %c0_i32, %c0_i32_0 : i32, i32
  }
  func.func @transform_5(%arg0: i32) -> (i32, i32, i32) {
    %c0_i32 = arith.constant 0 : i32
    %c0_i32_0 = arith.constant 0 : i32
    %c0_i32_1 = arith.constant 0 : i32
    return %arg0, %c0_i32, %c0_i32_0 : i32, i32, i32
  }
  func.func @transform_6(%arg0: i32) -> (i32, i32, i32) {
    %c0_i32 = arith.constant 0 : i32
    %c0_i32_0 = arith.constant 0 : i32
    %c0_i32_1 = arith.constant 0 : i32
    return %arg0, %c0_i32, %c0_i32_0 : i32, i32, i32
  }
}

</mosaic_0001>

<llo_original>
// kernel: tpu_custom_call.1
$region0: #{tpu_custom_call.1}
  #allocation0 [shape = 'u32[]', space=smem, size = 0x4, offset = 0x4, fixed_abs, tag = 'smem constant byte address 0x4 - core index']
  #allocation1 [shape = 'u32[144,128]{1,0:T(1,128)}', space=vmem, size = 0x12000, scoped, tag = 'internal scratch']
  %s0 = inlined_call_operand.hbm [shape: f32[2,8,32], index: 0, kind: input, shape index: {}]
  %s1 = inlined_call_operand.hbm [shape: f32[2,8,32], index: 1, kind: input, shape index: {}]
  %s2 = inlined_call_operand.hbm [shape: f32[32,32], index: 2, kind: input, shape index: {}]
  %s3 = inlined_call_operand.hbm [shape: f32[32,32], index: 3, kind: input, shape index: {}]
  %s4 = inlined_call_operand.vmem [shape: f32[1,32], index: 4, kind: input, shape index: {}]
  %s5 = inlined_call_operand.hbm [shape: f32[2,8,32], index: 5, kind: output, shape index: {0}]
  %s6 = inlined_call_operand.hbm [shape: f32[2,8,8], index: 6, kind: output, shape index: {1}]
  %7 = xla_tuple %s5, %s6
  %s8 = sld [smem:[#allocation0]]
  $region77: #{tpu_custom_call.1} parent=0
    _
  %s10 = ssub.s32 1, %s8
  %s11 = scalar_select 0, %s10, %s8
  $region1: #{tpu_custom_call.1} parent=0
    #allocation2 [shape = 'u8[8192]{0}', space=vmem, size = 0x2000, scoped, tag = 'input window, operand 0']
    #allocation3 [shape = 's32[2]{0}', space=sflag, size = 0x8, scoped, tag = 'scoped memory for tpu_custom_call.1']
    #allocation4 [shape = 's32[2]{0}', space=sflag, size = 0x8, scoped, tag = 'scoped memory for tpu_custom_call.1']
    #allocation5 [shape = 'u8[8192]{0}', space=vmem, size = 0x2000, scoped, tag = 'input window, operand 1']
    #allocation6 [shape = 's32[2]{0}', space=sflag, size = 0x8, scoped, tag = 'scoped memory for tpu_custom_call.1']
    #allocation7 [shape = 'u8[16384]{0}', space=vmem, size = 0x4000, scoped, tag = 'input window, operand 2, single buffered']
    #allocation8 [shape = 'u8[16384]{0}', space=vmem, size = 0x4000, scoped, tag = 'input window, operand 3, single buffered']
    #allocation9 [shape = 's32[1]{0}', space=sflag, size = 0x4, scoped, tag = 'scoped memory for tpu_custom_call.1']
    #allocation10 [shape = 'u8[8192]{0}', space=vmem, size = 0x2000, scoped, tag = 'output window, operand 0']
    #allocation11 [shape = 'u8[8192]{0}', space=vmem, size = 0x2000, scoped, tag = 'output window, operand 1']
    #allocation12 [shape = 's32[2]{0}', space=sflag, size = 0x8, scoped, tag = 'scoped memory for tpu_custom_call.1']
    %12 = vsyncpa [#allocation3], 0
    %s13 = scalar_lea.sflag [#allocation3], 1
    %14 = vsyncpa %s13, 0
    %15 = vsyncpa [#allocation6], 0
    %s16 = scalar_lea.sflag [#allocation6], 1
    %17 = vsyncpa %s16, 0
    %18 = vsyncpa [#allocation9], 0
    %19 = vsyncpa [#allocation4], 0
    %s20 = scalar_lea.sflag [#allocation4], 1
    %21 = vsyncpa %s20, 0
    %22 = vsyncpa [#allocation12], 0
    %s23 = scalar_lea.sflag [#allocation12], 1
    %24 = vsyncpa %s23, 0
    loop: start=0, step=1, limit=4
    $region2: #{tpu_custom_call.1} parent=1 // loop_pre_header
      _
    $region3: #{tpu_custom_call.1} parent=1 // loop_header
      %s26 = sphi 0, %s30
      %p27 = scmp.ge.s32.totalorder %s26, 4
      %s36 = sphi 0, %s38
      %s39 = sphi 0, %s36
      %s40 = sphi 0, %s39
      %s56 = sphi 0, %s40
      %s62 = sphi 0, %s64
      %s65 = sphi 0, %s62
      %s66 = sphi 0, %s65
      %s82 = sphi 0, %s66
      %s86 = sphi 0, %s86
      %s88 = sphi 0, %s86
      %s89 = sphi 0, %s88
      %s103 = sphi 0, %s89
      %s107 = sphi 0, %s107
      %s109 = sphi 0, %s107
      %s110 = sphi 0, %s109
      %s124 = sphi 0, %s110
      %s128 = sphi 0, %s128
      %s130 = sphi 0, %s128
      %s131 = sphi 0, %s130
      %s145 = sphi 0, %s131
      %s151 = sphi 0, %s153
      %s154 = sphi 0, %s151
      %s155 = sphi 0, %s154
      %s171 = sphi 0, %s155
      %s177 = sphi 0, %s179
      %s180 = sphi 0, %s177
      %s181 = sphi 0, %s180
      %s197 = sphi 0, %s181
    $region4: #{tpu_custom_call.1} parent=1 // loop_header_branch
      %29 = sbr.rel (%p27) target = $region8
    $region5: #{tpu_custom_call.1} parent=1 // loop_body
      %s31 = ssub.s32 %s26, 1
      %s32 = ssub.s32 %s26, 2
      %s33 = sadd.s32 %s26, 1
      %s34 = ssub.s32 %s26, %s33
      %p35 = scmp.eq.s32.totalorder %s34, 0
      %s37 = sadd.s32 %s36, 1
      %s38 = scalar_select %p35, %s36, %s37
      %p41 = pneg %p35
      %p42 = scmp.eq.s32.totalorder %s26, 1
      %p43 = por %p41, %p42
      %p44 = scmp.ne.s32.totalorder %s36, %s39
      %p45 = scmp.eq.s32.totalorder %s26, 0
      %p46 = por %p44, %p45
      %p47 = scmp.ne.s32.totalorder %s36, %s39
      %p48 = scmp.eq.s32.totalorder %s31, 1
      %p49 = por %p47, %p48
      %p50 = scmp.ne.s32.totalorder %s39, %s40
      %p51 = scmp.eq.s32.totalorder %s31, 0
      %p52 = por %p50, %p51
      %p53 = scmp.ne.s32.totalorder %s39, %s40
      %p54 = scmp.eq.s32.totalorder %s32, 1
      %p55 = por %p53, %p54
      %p57 = scmp.ne.s32.totalorder %s40, %s56
      %p58 = scmp.eq.s32.totalorder %s32, 0
      %p59 = por %p57, %p58
      %s60 = ssub.s32 %s26, %s33
      %p61 = scmp.eq.s32.totalorder %s60, 0
      %s63 = sadd.s32 %s62, 1
      %s64 = scalar_select %p61, %s62, %s63
      %p67 = pneg %p61
      %p68 = scmp.eq.s32.totalorder %s26, 1
      %p69 = por %p67, %p68
      %p70 = scmp.ne.s32.totalorder %s62, %s65
      %p71 = scmp.eq.s32.totalorder %s26, 0
      %p72 = por %p70, %p71
      %p73 = scmp.ne.s32.totalorder %s62, %s65
      %p74 = scmp.eq.s32.totalorder %s31, 1
      %p75 = por %p73, %p74
      %p76 = scmp.ne.s32.totalorder %s65, %s66
      %p77 = scmp.eq.s32.totalorder %s31, 0
      %p78 = por %p76, %p77
      %p79 = scmp.ne.s32.totalorder %s65, %s66
      %p80 = scmp.eq.s32.totalorder %s32, 1
      %p81 = por %p79, %p80
      %p83 = scmp.ne.s32.totalorder %s66, %s82
      %p84 = scmp.eq.s32.totalorder %s32, 0
      %p85 = por %p83, %p84
      %s87 = sadd.s32 %s86, 1
      %p90 = scmp.eq.s32.totalorder %s26, 1
      %p91 = scmp.ne.s32.totalorder %s86, %s88
      %p92 = scmp.eq.s32.totalorder %s26, 0
      %p93 = por %p91, %p92
      %p94 = scmp.ne.s32.totalorder %s86, %s88
      %p95 = scmp.eq.s32.totalorder %s31, 1
      %p96 = por %p94, %p95
      %p97 = scmp.ne.s32.totalorder %s88, %s89
      %p98 = scmp.eq.s32.totalorder %s31, 0
      %p99 = por %p97, %p98
      %p100 = scmp.ne.s32.totalorder %s88, %s89
      %p101 = scmp.eq.s32.totalorder %s32, 1
      %p102 = por %p100, %p101
      %p104 = scmp.ne.s32.totalorder %s89, %s103
      %p105 = scmp.eq.s32.totalorder %s32, 0
      %p106 = por %p104, %p105
      %s108 = sadd.s32 %s107, 1
      %p111 = scmp.eq.s32.totalorder %s26, 1
      %p112 = scmp.ne.s32.totalorder %s107, %s109
      %p113 = scmp.eq.s32.totalorder %s26, 0
      %p114 = por %p112, %p113
      %p115 = scmp.ne.s32.totalorder %s107, %s109
      %p116 = scmp.eq.s32.totalorder %s31, 1
      %p117 = por %p115, %p116
      %p118 = scmp.ne.s32.totalorder %s109, %s110
      %p119 = scmp.eq.s32.totalorder %s31, 0
      %p120 = por %p118, %p119
      %p121 = scmp.ne.s32.totalorder %s109, %s110
      %p122 = scmp.eq.s32.totalorder %s32, 1
      %p123 = por %p121, %p122
      %p125 = scmp.ne.s32.totalorder %s110, %s124
      %p126 = scmp.eq.s32.totalorder %s32, 0
      %p127 = por %p125, %p126
      %s129 = sadd.s32 %s128, 1
      %p132 = scmp.eq.s32.totalorder %s26, 1
      %p133 = scmp.ne.s32.totalorder %s128, %s130
      %p134 = scmp.eq.s32.totalorder %s26, 0
      %p135 = por %p133, %p134
      %p136 = scmp.ne.s32.totalorder %s128, %s130
      %p137 = scmp.eq.s32.totalorder %s31, 1
      %p138 = por %p136, %p137
      %p139 = scmp.ne.s32.totalorder %s130, %s131
      %p140 = scmp.eq.s32.totalorder %s31, 0
      %p141 = por %p139, %p140
      %p142 = scmp.ne.s32.totalorder %s130, %s131
      %p143 = scmp.eq.s32.totalorder %s32, 1
      %p144 = por %p142, %p143
      %p146 = scmp.ne.s32.totalorder %s131, %s145
      %p147 = scmp.eq.s32.totalorder %s32, 0
      %p148 = por %p146, %p147
      %s149 = ssub.s32 %s26, %s33
      %p150 = scmp.eq.s32.totalorder %s149, 0
      %s152 = sadd.s32 %s151, 1
      %s153 = scalar_select %p150, %s151, %s152
      %p156 = pneg %p150
      %p157 = scmp.eq.s32.totalorder %s26, 1
      %p158 = por %p156, %p157
      %p159 = scmp.ne.s32.totalorder %s151, %s154
      %p160 = scmp.eq.s32.totalorder %s26, 0
      %p161 = por %p159, %p160
      %p162 = scmp.ne.s32.totalorder %s151, %s154
      %p163 = scmp.eq.s32.totalorder %s31, 1
      %p164 = por %p162, %p163
      %p165 = scmp.ne.s32.totalorder %s154, %s155
      %p166 = scmp.eq.s32.totalorder %s31, 0
      %p167 = por %p165, %p166
      %p168 = scmp.ne.s32.totalorder %s154, %s155
      %p169 = scmp.eq.s32.totalorder %s32, 1
      %p170 = por %p168, %p169
      %p172 = scmp.ne.s32.totalorder %s155, %s171
      %p173 = scmp.eq.s32.totalorder %s32, 0
      %p174 = por %p172, %p173
      %s175 = ssub.s32 %s26, %s33
      %p176 = scmp.eq.s32.totalorder %s175, 0
      %s178 = sadd.s32 %s177, 1
      %s179 = scalar_select %p176, %s177, %s178
      %p182 = pneg %p176
      %p183 = scmp.eq.s32.totalorder %s26, 1
      %p184 = por %p182, %p183
      %p185 = scmp.ne.s32.totalorder %s177, %s180
      %p186 = scmp.eq.s32.totalorder %s26, 0
      %p187 = por %p185, %p186
      %p188 = scmp.ne.s32.totalorder %s177, %s180
      %p189 = scmp.eq.s32.totalorder %s31, 1
      %p190 = por %p188, %p189
      %p191 = scmp.ne.s32.totalorder %s180, %s181
      %p192 = scmp.eq.s32.totalorder %s31, 0
      %p193 = por %p191, %p192
      %p194 = scmp.ne.s32.totalorder %s180, %s181
      %p195 = scmp.eq.s32.totalorder %s32, 1
      %p196 = por %p194, %p195
      %p198 = scmp.ne.s32.totalorder %s181, %s197
      %p199 = scmp.eq.s32.totalorder %s32, 0
      %p200 = por %p198, %p199
      %p201 = scmp.le.s32.totalorder 1, %s26
      %p202 = scmp.lt.s32.totalorder %s26, 3
      %p203 = pnand %p201, %p202
      %p204 = pneg %p203
      // Predicated region
      $region9: #{tpu_custom_call.1} parent=5 // pred_check
        _
      $region10: #{tpu_custom_call.1} parent=5 // pred_check_branch
        %206 = sbr.rel (%p203) target = $region12
      $region11: #{tpu_custom_call.1} parent=5 // pred_region
        %s207 = ssub.s32 %s26, 1
        // Predicated region
        $region13: #{tpu_custom_call.1} parent=11 // pred_check
          %p208 = pneg %p99
        $region14: #{tpu_custom_call.1} parent=11 // pred_check_branch
          %210 = sbr.rel (%p208) target = $region16
        $region15: #{tpu_custom_call.1} parent=11 // pred_region
          %s212 = ssub.s32 512, 512
          %213 = vsyncadd [#allocation6], %s212
          %s214 = sshll.u32 [#allocation7], 4
          %s215 = int_to_ptr.vmem [resolvable:$true] %s214
          %220 = dma.hbm_to_vmem [thread:$0]  %s2, 512, %s215, [#allocation6], 128, 128, 8
        $region16: #{tpu_custom_call.1} parent=11 // pred_fallthru
          _
        // Predicated region
        $region17: #{tpu_custom_call.1} parent=11 // pred_check
          %p221 = pneg %p120
        $region18: #{tpu_custom_call.1} parent=11 // pred_check_branch
          %223 = sbr.rel (%p221) target = $region20
        $region19: #{tpu_custom_call.1} parent=11 // pred_region
          %s225 = ssub.s32 512, 512
          %226 = vsyncadd [#allocation9], %s225
          %s227 = sshll.u32 [#allocation8], 4
          %s228 = int_to_ptr.vmem [resolvable:$true] %s227
          %233 = dma.hbm_to_vmem [thread:$0]  %s3, 512, %s228, [#allocation9], 128, 128, 8
        $region20: #{tpu_custom_call.1} parent=11 // pred_fallthru
          _
        // Predicated region
        $region21: #{tpu_custom_call.1} parent=11 // pred_check
          %p234 = pneg %p141
        $region22: #{tpu_custom_call.1} parent=11 // pred_check_branch
          %236 = sbr.rel (%p234) target = $region24
        $region23: #{tpu_custom_call.1} parent=11 // pred_region
          _
        $region24: #{tpu_custom_call.1} parent=11 // pred_fallthru
          _
      $region12: #{tpu_custom_call.1} parent=5 // pred_fallthru
        _
      %p237 = scmp.lt.s32.totalorder %s26, 2
      // Predicated region
      $region25: #{tpu_custom_call.1} parent=5 // pred_check
        %p238 = pneg %p237
      $region26: #{tpu_custom_call.1} parent=5 // pred_check_branch
        %240 = sbr.rel (%p238) target = $region28
      $region27: #{tpu_custom_call.1} parent=5 // pred_region
        // Predicated region
        $region29: #{tpu_custom_call.1} parent=27 // pred_check
          %p241 = pneg %p46
        $region30: #{tpu_custom_call.1} parent=27 // pred_check_branch
          %243 = sbr.rel (%p241) target = $region32
        $region31: #{tpu_custom_call.1} parent=27 // pred_region
          %s244 = sand.u32 %s36, 1
          %s245 = scalar_lea.sflag [#allocation3], %s244
          %s246 = sand.u32 %s36, 1
          %s247 = smul.addr %s246, 8
          %s248 = scalar_lea.vmem [#allocation2], %s247
          %s250 = ssub.s32 128, 128
          %251 = vsyncadd %s245, %s250
          %s252 = smul.addr %s26, 128
          %s253 = scalar_lea.hbm %s0, %s252
          %s255 = sshll.u32 %s248, 4
          %s256 = int_to_ptr.vmem [resolvable:$true] %s255
          %258 = dma.hbm_to_vmem [thread:$0]  %s253, 128, %s256, %s245
        $region32: #{tpu_custom_call.1} parent=27 // pred_fallthru
          _
        // Predicated region
        $region33: #{tpu_custom_call.1} parent=27 // pred_check
          %p259 = pneg %p72
        $region34: #{tpu_custom_call.1} parent=27 // pred_check_branch
          %261 = sbr.rel (%p259) target = $region36
        $region35: #{tpu_custom_call.1} parent=27 // pred_region
          %s262 = sand.u32 %s26, 1
          %s263 = scalar_lea.sflag [#allocation6], %s262
          %s264 = sand.u32 %s62, 1
          %s265 = smul.addr %s264, 8
          %s266 = scalar_lea.vmem [#allocation5], %s265
          %s268 = ssub.s32 128, 128
          %269 = vsyncadd %s263, %s268
          %s270 = smul.addr %s26, 128
          %s271 = scalar_lea.hbm %s1, %s270
          %s273 = sshll.u32 %s266, 4
          %s274 = int_to_ptr.vmem [resolvable:$true] %s273
          %276 = dma.hbm_to_vmem [thread:$0]  %s271, 128, %s274, %s263
        $region36: #{tpu_custom_call.1} parent=27 // pred_fallthru
          _
      $region28: #{tpu_custom_call.1} parent=5 // pred_fallthru
        _
      %p277 = scmp.le.s32.totalorder 1, %s26
      %p278 = scmp.lt.s32.totalorder %s26, 3
      %p279 = pnand %p277, %p278
      %p280 = pneg %p279
      // Predicated region
      $region37: #{tpu_custom_call.1} parent=5 // pred_check
        _
      $region38: #{tpu_custom_call.1} parent=5 // pred_check_branch
        %282 = sbr.rel (%p279) target = $region40
      $region39: #{tpu_custom_call.1} parent=5 // pred_region
        %s283 = ssub.s32 %s26, 1
        %s284 = sand.u32 %s39, 1
        %s285 = scalar_lea.sflag [#allocation3], %s284
        %s286 = sand.u32 %s39, 1
        %s287 = smul.addr %s286, 8
        %s288 = scalar_lea.vmem [#allocation2], %s287
        // Predicated region
        $region41: #{tpu_custom_call.1} parent=39 // pred_check
          %p289 = pneg %p52
        $region42: #{tpu_custom_call.1} parent=39 // pred_check_branch
          %291 = sbr.rel (%p289) target = $region44
        $region43: #{tpu_custom_call.1} parent=39 // pred_region
          %292 = dma.done %s285, 128
        $region44: #{tpu_custom_call.1} parent=39 // pred_fallthru
          _
        %s293 = sand.u32 %s31, 1
        %s294 = scalar_lea.sflag [#allocation6], %s293
        %s295 = sand.u32 %s65, 1
        %s296 = smul.addr %s295, 8
        %s297 = scalar_lea.vmem [#allocation5], %s296
        // Predicated region
        $region45: #{tpu_custom_call.1} parent=39 // pred_check
          %p298 = pneg %p78
        $region46: #{tpu_custom_call.1} parent=39 // pred_check_branch
          %300 = sbr.rel (%p298) target = $region48
        $region47: #{tpu_custom_call.1} parent=39 // pred_region
          %301 = dma.done %s294, 128
        $region48: #{tpu_custom_call.1} parent=39 // pred_fallthru
          _
        // Predicated region
        $region49: #{tpu_custom_call.1} parent=39 // pred_check
          %p302 = pneg %p99
        $region50: #{tpu_custom_call.1} parent=39 // pred_check_branch
          %304 = sbr.rel (%p302) target = $region52
        $region51: #{tpu_custom_call.1} parent=39 // pred_region
          %305 = dma.done [#allocation6], 512
        $region52: #{tpu_custom_call.1} parent=39 // pred_fallthru
          _
        // Predicated region
        $region53: #{tpu_custom_call.1} parent=39 // pred_check
          %p306 = pneg %p120
        $region54: #{tpu_custom_call.1} parent=39 // pred_check_branch
          %308 = sbr.rel (%p306) target = $region56
        $region55: #{tpu_custom_call.1} parent=39 // pred_region
          %309 = dma.done [#allocation9], 512
        $region56: #{tpu_custom_call.1} parent=39 // pred_fallthru
          _
        %s310 = sand.u32 %s39, 1
        %s311 = scalar_lea.sflag [#allocation3], %s310
        %s312 = sand.u32 %s39, 1
        %s313 = smul.addr %s312, 8
        %s314 = scalar_lea.vmem [#allocation2], %s313
        %p315 = pneg %p52
        %p316 = pneg %p49
        %s317 = sand.u32 %s31, 1
        %s318 = scalar_lea.sflag [#allocation6], %s317
        %s319 = sand.u32 %s65, 1
        %s320 = smul.addr %s319, 8
        %s321 = scalar_lea.vmem [#allocation5], %s320
        %p322 = pneg %p78
        %p323 = pneg %p75
        %p324 = pneg %p99
        %p325 = pneg %p96
        %p326 = pneg %p120
        %p327 = pneg %p117
        %p328 = pneg %p141
        %p329 = pneg %p138
        %p330 = pneg %p167
        %p331 = pneg %p164
        %s332 = sand.u32 %s154, 1
        %s333 = scalar_lea.sflag [#allocation4], %s332
        %s334 = sand.u32 %s154, 1
        %s335 = smul.addr %s334, 8
        %s336 = scalar_lea.vmem [#allocation10], %s335
        %p337 = pneg %p193
        %p338 = pneg %p190
        %s339 = sand.u32 %s180, 1
        %s340 = scalar_lea.sflag [#allocation12], %s339
        %s341 = sand.u32 %s180, 1
        %s342 = smul.addr %s341, 8
        %s343 = scalar_lea.vmem [#allocation11], %s342
        %v344 = vld [vmem:[%s288] sm:$0xff]
        %v345 = vld [vmem:[%s297] sm:$0xff]
        %vm346 = vcmask 261120
        %v348 = vsel %vm346, %v344, 0
        %v351 = vsel %vm346, %v345, 0
        %353 = vmatprep.subr.mxu0 0.0
        %354 = vmatpush1.xpose.msra.mxu0 %v351
        %355 = vmatprep.subr.mxu0 0.0
        %356 = vmatpush1.xpose.msra.mxu0 0.0
        %357 = vmatprep.subr.mxu0 0.0
        %358 = vmatpush1.xpose.msra.mxu0 0.0
        %359 = vmatprep.subr.mxu0 0.0
        %360 = vmatpush1.xpose.msra.mxu0 0.0
        %361 = vmatprep.subr.mxu0 0.0
        %362 = vmatpush1.xpose.msra.mxu0 0.0
        %363 = vmatprep.subr.mxu0 0.0
        %364 = vmatpush1.xpose.msra.mxu0 0.0
        %365 = vmatprep.subr.mxu0 0.0
        %366 = vmatpush1.xpose.msra.mxu0 0.0
        %367 = vmatprep.subr.mxu0 0.0
        %368 = vmatpush1.xpose.msra.mxu0 0.0
        %369 = vmatprep.subr.mxu0 0.0
        %370 = vmatpush1.xpose.msra.mxu0 0.0
        %371 = vmatprep.subr.mxu0 0.0
        %372 = vmatpush1.xpose.msra.mxu0 0.0
        %373 = vmatprep.subr.mxu0 0.0
        %374 = vmatpush1.xpose.msra.mxu0 0.0
        %375 = vmatprep.subr.mxu0 0.0
        %376 = vmatpush1.xpose.msra.mxu0 0.0
        %377 = vmatprep.subr.mxu0 0.0
        %378 = vmatpush1.xpose.msra.mxu0 0.0
        %379 = vmatprep.subr.mxu0 0.0
        %380 = vmatpush1.xpose.msra.mxu0 0.0
        %381 = vmatprep.subr.mxu0 0.0
        %382 = vmatpush1.xpose.msra.mxu0 0.0
        %383 = vmatprep.subr.mxu0 0.0
        %384 = vmatpush1.xpose.msra.mxu0 0.0
        %385 = vmatprep.subr.mxu0 0.0
        %386 = vmatpush1.xpose.msra.mxu0 0.0
        %387 = vmatprep.subr.mxu0 0.0
        %388 = vmatpush1.xpose.msra.mxu0 0.0
        %389 = vmatprep.subr.mxu0 0.0
        %390 = vmatpush1.xpose.msra.mxu0 0.0
        %391 = vmatprep.subr.mxu0 0.0
        %392 = vmatpush1.xpose.msra.mxu0 0.0
        %393 = vmatprep.subr.mxu0 0.0
        %394 = vmatpush1.xpose.msra.mxu0 0.0
        %395 = vmatprep.subr.mxu0 0.0
        %396 = vmatpush1.xpose.msra.mxu0 0.0
        %397 = vmatprep.subr.mxu0 0.0
        %398 = vmatpush1.xpose.msra.mxu0 0.0
        %399 = vmatprep.subr.mxu0 0.0
        %400 = vmatpush1.xpose.msra.mxu0 0.0
        %401 = vmatprep.subr.mxu0 0.0
        %402 = vmatpush1.xpose.msra.mxu0 0.0
        %403 = vmatprep.subr.mxu0 0.0
        %404 = vmatpush1.xpose.msra.mxu0 0.0
        %405 = vmatprep.subr.mxu0 0.0
        %406 = vmatpush1.xpose.msra.mxu0 0.0
        %407 = vmatprep.subr.mxu0 0.0
        %408 = vmatpush1.xpose.msra.mxu0 0.0
        %409 = vmatprep.subr.mxu0 0.0
        %410 = vmatpush1.xpose.msra.mxu0 0.0
        %411 = vmatprep.subr.mxu0 0.0
        %412 = vmatpush1.xpose.msra.mxu0 0.0
        %413 = vmatprep.subr.mxu0 0.0
        %414 = vmatpush1.xpose.msra.mxu0 0.0
        %415 = vmatprep.subr.mxu0 0.0
        %416 = vmatpush1.xpose.msra.mxu0 0.0
        %417 = vmatprep.mubr.f32.mxu0 0.0
        %418 = vmatmul.mubr.f32.gmra.mrb[0].mxu0 %v348
        %v419 = vpop.f32.mrb[0].mxu0
        %v420 = vadd.f32 0.0, %v419
        %v421 = vpop.f32.mrb[0].mxu0
        %422 = vdwg.mxu0
        %vm423 = vcmask 64512
        %v424 = vsel %vm423, %v420, -inf
        %425 = vmax.xlane.f32.xlu0 %v424
        %v426 = vpop.xlane.xlu0 %425
        %v427 = vsub.f32 %v420, %v426
        %v428 = vmul.f32 %v427, 1.442695
        %v429 = vpow.pop %v428
        %v430 = vsel %vm423, %v429, 0.0
        %431 = vadd.xlane.f32.xlu0 %v430
        %v432 = vpop.xlane.xlu0 %431
        %v433 = vrcp.pop %v432
        %v434 = vmul.f32 %v429, %v433
        %v436 = vsel %vm423, %v434, 0
        %438 = vmatprep.subr.mxu0 0.0
        %439 = vmatpush1.msra.mxu0 %v345
        %440 = vmatprep.subr.mxu0 0.0
        %441 = vmatpush1.msra.mxu0 0.0
        %442 = vmatprep.subr.mxu0 0.0
        %443 = vmatpush1.msra.mxu0 0.0
        %444 = vmatprep.subr.mxu0 0.0
        %445 = vmatpush1.msra.mxu0 0.0
        %446 = vmatprep.subr.mxu0 0.0
        %447 = vmatpush1.msra.mxu0 0.0
        %448 = vmatprep.subr.mxu0 0.0
        %449 = vmatpush1.msra.mxu0 0.0
        %450 = vmatprep.subr.mxu0 0.0
        %451 = vmatpush1.msra.mxu0 0.0
        %452 = vmatprep.subr.mxu0 0.0
        %453 = vmatpush1.msra.mxu0 0.0
        %454 = vmatprep.subr.mxu0 0.0
        %455 = vmatpush1.msra.mxu0 0.0
        %456 = vmatprep.subr.mxu0 0.0
        %457 = vmatpush1.msra.mxu0 0.0
        %458 = vmatprep.subr.mxu0 0.0
        %459 = vmatpush1.msra.mxu0 0.0
        %460 = vmatprep.subr.mxu0 0.0
        %461 = vmatpush1.msra.mxu0 0.0
        %462 = vmatprep.subr.mxu0 0.0
        %463 = vmatpush1.msra.mxu0 0.0
        %464 = vmatprep.subr.mxu0 0.0
        %465 = vmatpush1.msra.mxu0 0.0
        %466 = vmatprep.subr.mxu0 0.0
        %467 = vmatpush1.msra.mxu0 0.0
        %468 = vmatprep.subr.mxu0 0.0
        %469 = vmatpush1.msra.mxu0 0.0
        %470 = vmatprep.subr.mxu0 0.0
        %471 = vmatpush1.msra.mxu0 0.0
        %472 = vmatprep.subr.mxu0 0.0
        %473 = vmatpush1.msra.mxu0 0.0
        %474 = vmatprep.subr.mxu0 0.0
        %475 = vmatpush1.msra.mxu0 0.0
        %476 = vmatprep.subr.mxu0 0.0
        %477 = vmatpush1.msra.mxu0 0.0
        %478 = vmatprep.subr.mxu0 0.0
        %479 = vmatpush1.msra.mxu0 0.0
        %480 = vmatprep.subr.mxu0 0.0
        %481 = vmatpush1.msra.mxu0 0.0
        %482 = vmatprep.subr.mxu0 0.0
        %483 = vmatpush1.msra.mxu0 0.0
        %484 = vmatprep.subr.mxu0 0.0
        %485 = vmatpush1.msra.mxu0 0.0
        %486 = vmatprep.subr.mxu0 0.0
        %487 = vmatpush1.msra.mxu0 0.0
        %488 = vmatprep.subr.mxu0 0.0
        %489 = vmatpush1.msra.mxu0 0.0
        %490 = vmatprep.subr.mxu0 0.0
        %491 = vmatpush1.msra.mxu0 0.0
        %492 = vmatprep.subr.mxu0 0.0
        %493 = vmatpush1.msra.mxu0 0.0
        %494 = vmatprep.subr.mxu0 0.0
        %495 = vmatpush1.msra.mxu0 0.0
        %496 = vmatprep.subr.mxu0 0.0
        %497 = vmatpush1.msra.mxu0 0.0
        %498 = vmatprep.subr.mxu0 0.0
        %499 = vmatpush1.msra.mxu0 0.0
        %500 = vmatprep.subr.mxu0 0.0
        %501 = vmatpush1.msra.mxu0 0.0
        %502 = vmatprep.mubr.f32.mxu0 0.0
        %503 = vmatmul.mubr.f32.gmra.mrb[0].mxu0 %v436
        %v504 = vpop.f32.mrb[0].mxu0
        %v505 = vadd.f32 0.0, %v504
        %v506 = vpop.f32.mrb[0].mxu0
        %507 = vdwg.mxu0
        %v508 = vld [vmem:[#allocation7] sm:$0xff]
        %v509 = vld [vmem:[#allocation7 + $0x8] sm:$0xff]
        %v510 = vld [vmem:[#allocation7 + $0x10] sm:$0xff]
        %v511 = vld [vmem:[#allocation7 + $0x18] sm:$0xff]
        %v512 = vld [vmem:[#allocation8] sm:$0xff]
        %v513 = vld [vmem:[#allocation8 + $0x8] sm:$0xff]
        %v514 = vld [vmem:[#allocation8 + $0x10] sm:$0xff]
        %v515 = vld [vmem:[#allocation8 + $0x18] sm:$0xff]
        %516 = vmatprep.subr.mxu0 0.0
        %517 = vmatpush1.msra.mxu0 %v512
        %518 = vmatprep.subr.mxu0 0.0
        %519 = vmatpush1.msra.mxu0 %v513
        %520 = vmatprep.subr.mxu0 0.0
        %521 = vmatpush1.msra.mxu0 %v514
        %522 = vmatprep.subr.mxu0 0.0
        %523 = vmatpush1.msra.mxu0 %v515
        %524 = vmatprep.subr.mxu0 0.0
        %525 = vmatpush1.msra.mxu0 0.0
        %526 = vmatprep.subr.mxu0 0.0
        %527 = vmatpush1.msra.mxu0 0.0
        %528 = vmatprep.subr.mxu0 0.0
        %529 = vmatpush1.msra.mxu0 0.0
        %530 = vmatprep.subr.mxu0 0.0
        %531 = vmatpush1.msra.mxu0 0.0
        %532 = vmatprep.subr.mxu0 0.0
        %533 = vmatpush1.msra.mxu0 0.0
        %534 = vmatprep.subr.mxu0 0.0
        %535 = vmatpush1.msra.mxu0 0.0
        %536 = vmatprep.subr.mxu0 0.0
        %537 = vmatpush1.msra.mxu0 0.0
        %538 = vmatprep.subr.mxu0 0.0
        %539 = vmatpush1.msra.mxu0 0.0
        %540 = vmatprep.subr.mxu0 0.0
        %541 = vmatpush1.msra.mxu0 0.0
        %542 = vmatprep.subr.mxu0 0.0
        %543 = vmatpush1.msra.mxu0 0.0
        %544 = vmatprep.subr.mxu0 0.0
        %545 = vmatpush1.msra.mxu0 0.0
        %546 = vmatprep.subr.mxu0 0.0
        %547 = vmatpush1.msra.mxu0 0.0
        %548 = vmatprep.subr.mxu0 0.0
        %549 = vmatpush1.msra.mxu0 0.0
        %550 = vmatprep.subr.mxu0 0.0
        %551 = vmatpush1.msra.mxu0 0.0
        %552 = vmatprep.subr.mxu0 0.0
        %553 = vmatpush1.msra.mxu0 0.0
        %554 = vmatprep.subr.mxu0 0.0
        %555 = vmatpush1.msra.mxu0 0.0
        %556 = vmatprep.subr.mxu0 0.0
        %557 = vmatpush1.msra.mxu0 0.0
        %558 = vmatprep.subr.mxu0 0.0
        %559 = vmatpush1.msra.mxu0 0.0
        %560 = vmatprep.subr.mxu0 0.0
        %561 = vmatpush1.msra.mxu0 0.0
        %562 = vmatprep.subr.mxu0 0.0
        %563 = vmatpush1.msra.mxu0 0.0
        %564 = vmatprep.subr.mxu0 0.0
        %565 = vmatpush1.msra.mxu0 0.0
        %566 = vmatprep.subr.mxu0 0.0
        %567 = vmatpush1.msra.mxu0 0.0
        %568 = vmatprep.subr.mxu0 0.0
        %569 = vmatpush1.msra.mxu0 0.0
        %570 = vmatprep.subr.mxu0 0.0
        %571 = vmatpush1.msra.mxu0 0.0
        %572 = vmatprep.subr.mxu0 0.0
        %573 = vmatpush1.msra.mxu0 0.0
        %574 = vmatprep.subr.mxu0 0.0
        %575 = vmatpush1.msra.mxu0 0.0
        %576 = vmatprep.subr.mxu0 0.0
        %577 = vmatpush1.msra.mxu0 0.0
        %578 = vmatprep.subr.mxu0 0.0
        %579 = vmatpush1.msra.mxu0 0.0
        %580 = vmatprep.mubr.f32.mxu0 0.0
        %581 = vmatmul.mubr.f32.gmra.mrb[0].mxu0 %v348
        %v582 = vpop.f32.mrb[0].mxu0
        %v583 = vadd.f32 0.0, %v582
        %v584 = vpop.f32.mrb[0].mxu0
        %585 = vdwg.mxu0
        %v587 = vsel %vm346, %v505, 0
        %589 = vmatprep.subr.mxu0 0.0
        %590 = vmatpush1.msra.mxu0 %v508
        %591 = vmatprep.subr.mxu0 0.0
        %592 = vmatpush1.msra.mxu0 %v509
        %593 = vmatprep.subr.mxu0 0.0
        %594 = vmatpush1.msra.mxu0 %v510
        %595 = vmatprep.subr.mxu0 0.0
        %596 = vmatpush1.msra.mxu0 %v511
        %597 = vmatprep.subr.mxu0 0.0
        %598 = vmatpush1.msra.mxu0 0.0
        %599 = vmatprep.subr.mxu0 0.0
        %600 = vmatpush1.msra.mxu0 0.0
        %601 = vmatprep.subr.mxu0 0.0
        %602 = vmatpush1.msra.mxu0 0.0
        %603 = vmatprep.subr.mxu0 0.0
        %604 = vmatpush1.msra.mxu0 0.0
        %605 = vmatprep.subr.mxu0 0.0
        %606 = vmatpush1.msra.mxu0 0.0
        %607 = vmatprep.subr.mxu0 0.0
        %608 = vmatpush1.msra.mxu0 0.0
        %609 = vmatprep.subr.mxu0 0.0
        %610 = vmatpush1.msra.mxu0 0.0
        %611 = vmatprep.subr.mxu0 0.0
        %612 = vmatpush1.msra.mxu0 0.0
        %613 = vmatprep.subr.mxu0 0.0
        %614 = vmatpush1.msra.mxu0 0.0
        %615 = vmatprep.subr.mxu0 0.0
        %616 = vmatpush1.msra.mxu0 0.0
        %617 = vmatprep.subr.mxu0 0.0
        %618 = vmatpush1.msra.mxu0 0.0
        %619 = vmatprep.subr.mxu0 0.0
        %620 = vmatpush1.msra.mxu0 0.0
        %621 = vmatprep.subr.mxu0 0.0
        %622 = vmatpush1.msra.mxu0 0.0
        %623 = vmatprep.subr.mxu0 0.0
        %624 = vmatpush1.msra.mxu0 0.0
        %625 = vmatprep.subr.mxu0 0.0
        %626 = vmatpush1.msra.mxu0 0.0
        %627 = vmatprep.subr.mxu0 0.0
        %628 = vmatpush1.msra.mxu0 0.0
        %629 = vmatprep.subr.mxu0 0.0
        %630 = vmatpush1.msra.mxu0 0.0
        %631 = vmatprep.subr.mxu0 0.0
        %632 = vmatpush1.msra.mxu0 0.0
        %633 = vmatprep.subr.mxu0 0.0
        %634 = vmatpush1.msra.mxu0 0.0
        %635 = vmatprep.subr.mxu0 0.0
        %636 = vmatpush1.msra.mxu0 0.0
        %637 = vmatprep.subr.mxu0 0.0
        %638 = vmatpush1.msra.mxu0 0.0
        %639 = vmatprep.subr.mxu0 0.0
        %640 = vmatpush1.msra.mxu0 0.0
        %641 = vmatprep.subr.mxu0 0.0
        %642 = vmatpush1.msra.mxu0 0.0
        %643 = vmatprep.subr.mxu0 0.0
        %644 = vmatpush1.msra.mxu0 0.0
        %645 = vmatprep.subr.mxu0 0.0
        %646 = vmatpush1.msra.mxu0 0.0
        %647 = vmatprep.subr.mxu0 0.0
        %648 = vmatpush1.msra.mxu0 0.0
        %649 = vmatprep.subr.mxu0 0.0
        %650 = vmatpush1.msra.mxu0 0.0
        %651 = vmatprep.subr.mxu0 0.0
        %652 = vmatpush1.msra.mxu0 0.0
        %653 = vmatprep.mubr.f32.mxu0 0.0
        %654 = vmatmul.mubr.f32.gmra.mrb[0].mxu0 %v587
        %v655 = vpop.f32.mrb[0].mxu0
        %v656 = vadd.f32 %v583, %v655
        %v657 = vpop.f32.mrb[0].mxu0
        %658 = vdwg.mxu0
        %v659 = vld [vmem:[%s4] sm:$0x1]
        %v661 = vlaneseq
        %v662 = vshrl.u32 %v661, 7
        %v663 = vsub.s32 0, %v662
        %v664 = vrot.slane %v659, %v663
        %v666 = vadd.f32 %v656, %v664
        %v667 = vtanh.pop %v666
        %668 = vst.msk [vmem:[%s336] sm:$0xff] %vm346, %v667
        %669 = vst.msk [vmem:[%s343] sm:$0xff] %vm423, %v434
        %s670 = sand.u32 %s154, 1
        %s671 = scalar_lea.sflag [#allocation4], %s670
        %s672 = sand.u32 %s154, 1
        %s673 = smul.addr %s672, 8
        %s674 = scalar_lea.vmem [#allocation10], %s673
        %s675 = sand.u32 %s180, 1
        %s676 = scalar_lea.sflag [#allocation12], %s675
        %s677 = sand.u32 %s180, 1
        %s678 = smul.addr %s677, 8
        %s679 = scalar_lea.vmem [#allocation11], %s678
        // Predicated region
        $region57: #{tpu_custom_call.1} parent=39 // pred_check
          %p680 = pneg %p164
        $region58: #{tpu_custom_call.1} parent=39 // pred_check_branch
          %682 = sbr.rel (%p680) target = $region60
        $region59: #{tpu_custom_call.1} parent=39 // pred_region
          %s684 = ssub.s32 128, 128
          %685 = vsyncadd %s671, %s684
          %s686 = smul.addr %s31, 128
          %s687 = scalar_lea.hbm %s5, %s686
          %s689 = sshll.u32 %s674, 4
          %s690 = int_to_ptr.vmem [resolvable:$true] %s689
          %692 = dma.vmem_to_hbm [thread:$0]  %s690, 128, %s687, %s671
        $region60: #{tpu_custom_call.1} parent=39 // pred_fallthru
          _
        // Predicated region
        $region61: #{tpu_custom_call.1} parent=39 // pred_check
          %p693 = pneg %p190
        $region62: #{tpu_custom_call.1} parent=39 // pred_check_branch
          %695 = sbr.rel (%p693) target = $region64
        $region63: #{tpu_custom_call.1} parent=39 // pred_region
          %s697 = ssub.s32 128, 128
          %698 = vsyncadd %s676, %s697
          %s699 = smul.addr %s31, 128
          %s700 = scalar_lea.hbm %s6, %s699
          %s702 = sshll.u32 %s679, 4
          %s703 = int_to_ptr.vmem [resolvable:$true] %s702
          %705 = dma.vmem_to_hbm [thread:$0]  %s703, 128, %s700, %s676
        $region64: #{tpu_custom_call.1} parent=39 // pred_fallthru
          _
      $region40: #{tpu_custom_call.1} parent=5 // pred_fallthru
        _
      %p706 = scmp.le.s32.totalorder 2, %s26
      // Predicated region
      $region65: #{tpu_custom_call.1} parent=5 // pred_check
        %p707 = pneg %p706
      $region66: #{tpu_custom_call.1} parent=5 // pred_check_branch
        %709 = sbr.rel (%p707) target = $region68
      $region67: #{tpu_custom_call.1} parent=5 // pred_region
        %s710 = ssub.s32 %s26, 2
        // Predicated region
        $region69: #{tpu_custom_call.1} parent=67 // pred_check
          %p711 = pneg %p170
        $region70: #{tpu_custom_call.1} parent=67 // pred_check_branch
          %713 = sbr.rel (%p711) target = $region72
        $region71: #{tpu_custom_call.1} parent=67 // pred_region
          %s714 = sand.u32 %s155, 1
          %s715 = scalar_lea.sflag [#allocation4], %s714
          %s716 = sand.u32 %s155, 1
          %s717 = smul.addr %s716, 8
          %s718 = scalar_lea.vmem [#allocation10], %s717
          %719 = dma.done %s715, 128
        $region72: #{tpu_custom_call.1} parent=67 // pred_fallthru
          _
        // Predicated region
        $region73: #{tpu_custom_call.1} parent=67 // pred_check
          %p720 = pneg %p196
        $region74: #{tpu_custom_call.1} parent=67 // pred_check_branch
          %722 = sbr.rel (%p720) target = $region76
        $region75: #{tpu_custom_call.1} parent=67 // pred_region
          %s723 = sand.u32 %s181, 1
          %s724 = scalar_lea.sflag [#allocation12], %s723
          %s725 = sand.u32 %s181, 1
          %s726 = smul.addr %s725, 8
          %s727 = scalar_lea.vmem [#allocation11], %s726
          %728 = dma.done %s724, 128
        $region76: #{tpu_custom_call.1} parent=67 // pred_fallthru
          _
      $region68: #{tpu_custom_call.1} parent=5 // pred_fallthru
        _
    $region6: #{tpu_custom_call.1} parent=1 // loop_footer
      %s30 = sadd.s32 1, %s26
    $region7: #{tpu_custom_call.1} parent=1 // loop_footer_branch
      %25 = sbr.rel target = $region3
    $region8: #{tpu_custom_call.1} parent=1 // loop_exit
      _
    %729 = vsyncpa [#allocation3], 1
    %s730 = scalar_lea.sflag [#allocation3], 1
    %731 = vsyncpa %s730, 1
    %732 = vsyncpa [#allocation6], 1
    %s733 = scalar_lea.sflag [#allocation6], 1
    %734 = vsyncpa %s733, 1
    %735 = vsyncpa [#allocation9], 1
    %736 = vsyncpa [#allocation4], 1
    %s737 = scalar_lea.sflag [#allocation4], 1
    %738 = vsyncpa %s737, 1
    %739 = vsyncpa [#allocation12], 1
    %s740 = scalar_lea.sflag [#allocation12], 1
    %741 = vsyncpa %s740, 1

</llo_original>
